<compile_context>
chip_gen: v5e
topology: v5e:2x2
jax: 0.10.0
libtpu: 0.0.40
codegen_flags: <defaults>
</compile_context>

<pallas_src>
import functools
import math

import jax
import jax.numpy as jnp
from jax.experimental import pallas as pl
from jax.experimental.pallas import tpu as pltpu

LANE = 128
SUBLANE = 8
_X_BUF_BUDGET = 4 * 1024 * 1024   # bytes per pipeline buffer for the frame-feature tile


def _round_up(x, m):
    return (x + m - 1) // m * m


def _pick_t_tile(t, cap_frames):
    """Largest frame tile that (a) divides T exactly (the T axis is a reduction,
    so ragged frame blocks are not allowed) and (b) fits the VMEM buffer budget.
    Prefers the full T, then multiples of 8 (sublane-aligned)."""
    if t <= cap_frames:
        return t
    best = None
    for d in range(min(t, cap_frames), 0, -1):
        if t % d == 0:
            if d % SUBLANE == 0:
                return d
            if best is None:
                best = d
    return best if best is not None else t


# ---------------------------------------------------------------------------
# Fused kernel: running frame-sum over the T grid axis, then (at the last T
# step) mean + fc1/ReLU + fc2/ReLU + fc3.  Lane-padded weights are VMEM-resident.
# ---------------------------------------------------------------------------
def _asd2ttm_kernel(x_ref, w1_ref, b1_ref, w2_ref, b2_ref, w3_ref, b3_ref,
                    o_ref, acc_ref, *, inv_t):
    ti = pl.program_id(1)

    @pl.when(ti == 0)
    def _init():
        acc_ref[...] = jnp.zeros_like(acc_ref)

    # running frame-sum, accumulated in f32 regardless of the input dtype
    acc_ref[...] += jnp.sum(x_ref[...].astype(jnp.float32), axis=1)

    @pl.when(ti == pl.num_programs(1) - 1)
    def _finalize():
        m = acc_ref[...] * inv_t                                   # frame mean (bt, 256)
        h = jnp.dot(m, w1_ref[...], preferred_element_type=jnp.float32) + b1_ref[...]
        h = jnp.maximum(h, 0.0)                                    # ReLU
        h = jnp.dot(h, w2_ref[...], preferred_element_type=jnp.float32) + b2_ref[...]
        h = jnp.maximum(h, 0.0)                                    # ReLU
        o_ref[...] = (jnp.dot(h, w3_ref[...], preferred_element_type=jnp.float32)
                      + b3_ref[...])


def pad_params(params):
    """Zero-pad head weights/biases to lane-dense (128-multiple) shapes ONCE,
    at parameter-load time (hoisted out of the per-call forward path).
    Padding is exact: ReLU(0)=0 and zero rows/cols/biases contribute nothing."""
    f32 = jnp.float32
    f_in, h1 = params['w1'].shape
    h2 = params['w2'].shape[1]
    o = params['w3'].shape[1]
    h1p, h2p, op = _round_up(h1, LANE), _round_up(h2, LANE), _round_up(o, LANE)
    w1 = jnp.zeros((f_in, h1p), f32).at[:, :h1].set(params['w1'].astype(f32))
    b1 = jnp.zeros((1, h1p), f32).at[:, :h1].set(params['b1'].astype(f32)[None, :])
    w2 = jnp.zeros((h1p, h2p), f32).at[:h1, :h2].set(params['w2'].astype(f32))
    b2 = jnp.zeros((1, h2p), f32).at[:, :h2].set(params['b2'].astype(f32)[None, :])
    w3 = jnp.zeros((h2p, op), f32).at[:h2, :o].set(params['w3'].astype(f32))
    b3 = jnp.zeros((1, op), f32).at[:, :o].set(params['b3'].astype(f32)[None, :])
    return dict(w1=w1, b1=b1, w2=w2, b2=b2, w3=w3, b3=b3, out_dim=o)


def asd2ttm_forward(asd_frame_feats, padded_params, *, batch_tile=256, frame_tile=None):
    """asd_frame_feats: (N, T, 256) per-frame ASD backbone features
    (= outsAV.view(N, D, -1)); f32 or bf16.  padded_params from pad_params()."""
    n, t, f = asd_frame_feats.shape
    w1, b1 = padded_params['w1'], padded_params['b1']
    w2, b2 = padded_params['w2'], padded_params['b2']
    w3, b3 = padded_params['w3'], padded_params['b3']
    o = padded_params['out_dim']
    h1p, h2p, op = w1.shape[1], w2.shape[1], w3.shape[1]
    assert w1.shape[0] == f

    # ---- batch tile: large enough to amortize per-step overhead and fill the
    # MXU, capped by N; keep >=2 "parallel" grid steps when possible (v7x has
    # two TensorCores).  No input padding copy: the ragged last block is
    # handled by Pallas boundary blocks (row-independent math, padded output
    # rows are sliced off).
    bt = max(SUBLANE, min(_round_up(batch_tile, SUBLANE), _round_up(n, SUBLANE)))
    if pl.cdiv(n, bt) < 2 and n > SUBLANE:
        half = _round_up(pl.cdiv(n, 2), SUBLANE)
        if pl.cdiv(n, half) >= 2:
            bt = half
    grid_n = pl.cdiv(n, bt)

    # ---- frame tile: second grid axis (reduction, "arbitrary") bounds VMEM
    # for large T; must divide T exactly.
    xbytes = asd_frame_feats.dtype.itemsize
    if frame_tile is not None:
        assert t % frame_tile == 0, "frame_tile must divide T"
        t_tile = frame_tile
    else:
        t_tile = _pick_t_tile(t, max(1, _X_BUF_BUDGET // max(bt * f * xbytes, 1)))
    grid_t = t // t_tile

    # ---- explicit VMEM budget (double-buffered x/out, resident weights, acc scratch)
    x_tile_bytes = bt * t_tile * f * xbytes
    w_bytes = 4 * (f * h1p + h1p + h1p * h2p + h2p + h2p * op + op)
    out_bytes = bt * op * 4
    acc_bytes = bt * f * 4
    vmem_need = 2 * x_tile_bytes + 2 * w_bytes + 2 * out_bytes + acc_bytes
    vmem_limit = int(min(max(vmem_need + (4 << 20), 16 << 20), 48 << 20))

    n_out = grid_n * bt   # only the tiny logits allocation is padded, never x
    kernel = functools.partial(_asd2ttm_kernel, inv_t=1.0 / t)

    out = pl.pallas_call(
        kernel,
        out_shape=jax.ShapeDtypeStruct((n_out, op), jnp.float32),
        grid=(grid_n, grid_t),
        in_specs=[
            pl.BlockSpec((bt, t_tile, f), lambda i, k: (i, k, 0)),
            # constant block indices -> weights stay VMEM-resident across steps
            pl.BlockSpec((f, h1p), lambda i, k: (0, 0)),
            pl.BlockSpec((1, h1p), lambda i, k: (0, 0)),
            pl.BlockSpec((h1p, h2p), lambda i, k: (0, 0)),
            pl.BlockSpec((1, h2p), lambda i, k: (0, 0)),
            pl.BlockSpec((h2p, op), lambda i, k: (0, 0)),
            pl.BlockSpec((1, op), lambda i, k: (0, 0)),
        ],
        out_specs=pl.BlockSpec((bt, op), lambda i, k: (i, 0)),
        scratch_shapes=[pltpu.VMEM((bt, f), jnp.float32)],   # running frame-sum
        compiler_params=pltpu.CompilerParams(
            dimension_semantics=("parallel", "arbitrary"),
            vmem_limit_bytes=vmem_limit),
    )(asd_frame_feats, w1, b1, w2, b2, w3, b3)
    return out[:n, :o]


# ---------------------------------------------------------------------------
# Parameters (PyTorch nn.Linear default init) and pure-JAX reference.
# ---------------------------------------------------------------------------
def init_params(key, *, f_in=256, hidden_dim=32, hidden_dim2=32):
    ks = jax.random.split(key, 6)

    def lin(kw, kb, fan_in, fan_out):
        bound = 1.0 / math.sqrt(fan_in)
        w = jax.random.uniform(kw, (fan_in, fan_out), jnp.float32, -bound, bound)
        b = jax.random.uniform(kb, (fan_out,), jnp.float32, -bound, bound)
        return w, b

    w1, b1 = lin(ks[0], ks[1], f_in, hidden_dim)
    w2, b2 = lin(ks[2], ks[3], hidden_dim, hidden_dim2)
    w3, b3 = lin(ks[4], ks[5], hidden_dim2, 2)
    return dict(w1=w1, b1=b1, w2=w2, b2=b2, w3=w3, b3=b3)


def reference_forward(asd_frame_feats_f32, params):
    m = jnp.mean(asd_frame_feats_f32, axis=1)                    # (N, 256)
    h = jax.nn.relu(m @ params['w1'] + params['b1'])             # fc1 + ReLU
    h = jax.nn.relu(h @ params['w2'] + params['b2'])             # fc2 + ReLU
    return h @ params['w3'] + params['b3']                       # fc3 -> (N, 2)


if __name__ == "__main__":
    # small shapes: batch N=2, frames T=8, talkNet AV feature width 256,
    # args.hidden_dim = 32, args.hidden_dim2 = 32.
    N, T, F_IN = 2, 8, 256
    HIDDEN, HIDDEN2 = 32, 32

    key = jax.random.PRNGKey(0)
    k_feat, k_par, k_feat2 = jax.random.split(key, 3)

    params = init_params(k_par, f_in=F_IN, hidden_dim=HIDDEN, hidden_dim2=HIDDEN2)
    padded = pad_params(params)   # hoisted: pad once at parameter-load time

    # TODO(synk): stands in for asd_model(...) -> outsAV.view(N, D, -1); kept in
    # bf16 (as an upstream bf16 backbone would emit) to halve HBM traffic.
    feats_bf16 = jax.random.normal(k_feat, (N, T, F_IN), jnp.float32).astype(jnp.bfloat16)

    out = asd2ttm_forward(feats_bf16, padded)
    out = jax.block_until_ready(out)
    assert out.shape == (N, 2), out.shape
    ref = reference_forward(feats_bf16.astype(jnp.float32), params)
    if not jnp.allclose(out, ref, atol=1e-2, rtol=1e-2):
        raise AssertionError(f"Pallas/reference mismatch:\n{out}\n{ref}")

    # second check: f32 input, multi-step parallel batch grid with a ragged
    # last block (no input padding copy) and a 2-step frame-reduction axis.
    N2, T2 = 40, 16
    feats2 = jax.random.normal(k_feat2, (N2, T2, F_IN), jnp.float32)
    out2 = jax.block_until_ready(asd2ttm_forward(feats2, padded, frame_tile=8))
    assert out2.shape == (N2, 2), out2.shape
    ref2 = reference_forward(feats2, params)
    if not jnp.allclose(out2, ref2, atol=1e-3, rtol=1e-3):
        raise AssertionError(f"Pallas/reference mismatch (test 2):\n{out2}\n{ref2}")

    print("KERNEL_OK")
</pallas_src>

<mosaic_0001>
module attributes {stable_mosaic.version = 11 : i64} {
  func.func @_asd2ttm_kernel(%arg0: i32, %arg1: i32, %arg2: memref<8x8x256xbf16, #tpu.memory_space<vmem>>, %arg3: memref<256x128xf32, #tpu.memory_space<vmem>>, %arg4: memref<1x128xf32, #tpu.memory_space<vmem>>, %arg5: memref<128x128xf32, #tpu.memory_space<vmem>>, %arg6: memref<1x128xf32, #tpu.memory_space<vmem>>, %arg7: memref<128x128xf32, #tpu.memory_space<vmem>>, %arg8: memref<1x128xf32, #tpu.memory_space<vmem>>, %arg9: memref<8x128xf32, #tpu.memory_space<vmem>>, %arg10: memref<8x256xf32, #tpu.memory_space<vmem>>) attributes {dimension_semantics = [#tpu.dimension_semantics<parallel>, #tpu.dimension_semantics<arbitrary>], iteration_bounds = array<i64: 1, 1>, scalar_prefetch = 0 : i64, scratch_operands = 1 : i64, tpu.core_type = #tpu.core_type<tc>, window_params = [{transform_indices = @transform_0, window_bounds = array<i64: 8, 8, 256>}, {pipeline_mode = #tpu.pipeline_mode<synchronous>, transform_indices = @transform_1, window_bounds = array<i64: 256, 128>}, {pipeline_mode = #tpu.pipeline_mode<synchronous>, transform_indices = @transform_2, window_bounds = array<i64: 1, 128>}, {pipeline_mode = #tpu.pipeline_mode<synchronous>, transform_indices = @transform_3, window_bounds = array<i64: 128, 128>}, {pipeline_mode = #tpu.pipeline_mode<synchronous>, transform_indices = @transform_4, window_bounds = array<i64: 1, 128>}, {pipeline_mode = #tpu.pipeline_mode<synchronous>, transform_indices = @transform_5, window_bounds = array<i64: 128, 128>}, {pipeline_mode = #tpu.pipeline_mode<synchronous>, transform_indices = @transform_6, window_bounds = array<i64: 1, 128>}, {transform_indices = @transform_7, window_bounds = array<i64: 8, 128>}]} {
    %c0_i32 = arith.constant 0 : i32
    %0 = arith.cmpi eq, %arg1, %c0_i32 : i32
    %1 = arith.extui %0 : i1 to i32
    %c0_i32_0 = arith.constant 0 : i32
    %2 = arith.cmpi ne, %1, %c0_i32_0 : i32
    scf.if %2 {
      %cst_9 = arith.constant 0.000000e+00 : f32
      %12 = vector.broadcast %cst_9 : f32 to vector<8x256xf32>
      %c0_10 = arith.constant 0 : index
      %c0_11 = arith.constant 0 : index
      %13 = vector.load %arg10[%c0_10, %c0_11] : memref<8x256xf32, #tpu.memory_space<vmem>>, vector<8x256xf32>
      tpu.vector_store %arg10[%c0_10, %c0_11], %12 {strides = array<i32>} : memref<8x256xf32, #tpu.memory_space<vmem>>, vector<8x256xf32>,
    } else {
    }
    %c0 = arith.constant 0 : index
    %c0_1 = arith.constant 0 : index
    %3 = vector.load %arg10[%c0, %c0_1] : memref<8x256xf32, #tpu.memory_space<vmem>>, vector<8x256xf32>
    %c0_2 = arith.constant 0 : index
    %c0_3 = arith.constant 0 : index
    %c0_4 = arith.constant 0 : index
    %4 = vector.load %arg2[%c0_2, %c0_3, %c0_4] : memref<8x8x256xbf16, #tpu.memory_space<vmem>>, vector<8x8x256xbf16>
    %5 = arith.extf %4 : vector<8x8x256xbf16> to vector<8x8x256xf32>
    %cst = arith.constant dense<0.000000e+00> : vector<8x256xf32>
    %6 = vector.multi_reduction <add>, %5, %cst [1] : vector<8x8x256xf32> to vector<8x256xf32>
    %7 = arith.addf %3, %6 : vector<8x256xf32>
    %c0_5 = arith.constant 0 : index
    %c0_6 = arith.constant 0 : index
    %8 = vector.load %arg10[%c0_5, %c0_6] : memref<8x256xf32, #tpu.memory_space<vmem>>, vector<8x256xf32>
    tpu.vector_store %arg10[%c0_5, %c0_6], %7 {strides = array<i32>} : memref<8x256xf32, #tpu.memory_space<vmem>>, vector<8x256xf32>,
    %c0_i32_7 = arith.constant 0 : i32
    %9 = arith.cmpi eq, %arg1, %c0_i32_7 : i32
    %10 = arith.extui %9 : i1 to i32
    %c0_i32_8 = arith.constant 0 : i32
    %11 = arith.cmpi ne, %10, %c0_i32_8 : i32
    scf.if %11 {
      %c0_9 = arith.constant 0 : index
      %c0_10 = arith.constant 0 : index
      %12 = vector.load %arg10[%c0_9, %c0_10] : memref<8x256xf32, #tpu.memory_space<vmem>>, vector<8x256xf32>
      %cst_11 = arith.constant 1.250000e-01 : f32
      %13 = vector.broadcast %cst_11 : f32 to vector<8x256xf32>
      %14 = arith.mulf %12, %13 : vector<8x256xf32>
      %c0_12 = arith.constant 0 : index
      %c0_13 = arith.constant 0 : index
      %15 = vector.load %arg3[%c0_12, %c0_13] : memref<256x128xf32, #tpu.memory_space<vmem>>, vector<256x128xf32>
      %cst_14 = arith.constant dense<0.000000e+00> : vector<8x128xf32>
      %16 = tpu.matmul %14, %15, %cst_14 {dimension_numbers = #tpu.dot_dimension_numbers<[1], [0], [0], [1], [0, 0, 1, 1], [], []>} : vector<8x256xf32>, vector<256x128xf32>, vector<8x128xf32> -> vector<8x128xf32>
      %c0_15 = arith.constant 0 : index
      %c0_16 = arith.constant 0 : index
      %17 = vector.load %arg4[%c0_15, %c0_16] : memref<1x128xf32, #tpu.memory_space<vmem>>, vector<1x128xf32>
      %18 = vector.broadcast %17 : vector<1x128xf32> to vector<8x128xf32>
      %19 = arith.addf %16, %18 : vector<8x128xf32>
      %cst_17 = arith.constant 0.000000e+00 : f32
      %20 = vector.broadcast %cst_17 : f32 to vector<8x128xf32>
      %21 = arith.maximumf %19, %20 : vector<8x128xf32>
      %c0_18 = arith.constant 0 : index
      %c0_19 = arith.constant 0 : index
      %22 = vector.load %arg5[%c0_18, %c0_19] : memref<128x128xf32, #tpu.memory_space<vmem>>, vector<128x128xf32>
      %cst_20 = arith.constant dense<0.000000e+00> : vector<8x128xf32>
      %23 = tpu.matmul %21, %22, %cst_20 {dimension_numbers = #tpu.dot_dimension_numbers<[1], [0], [0], [1], [0, 0, 1, 1], [], []>} : vector<8x128xf32>, vector<128x128xf32>, vector<8x128xf32> -> vector<8x128xf32>
      %c0_21 = arith.constant 0 : index
      %c0_22 = arith.constant 0 : index
      %24 = vector.load %arg6[%c0_21, %c0_22] : memref<1x128xf32, #tpu.memory_space<vmem>>, vector<1x128xf32>
      %25 = vector.broadcast %24 : vector<1x128xf32> to vector<8x128xf32>
      %26 = arith.addf %23, %25 : vector<8x128xf32>
      %cst_23 = arith.constant 0.000000e+00 : f32
      %27 = vector.broadcast %cst_23 : f32 to vector<8x128xf32>
      %28 = arith.maximumf %26, %27 : vector<8x128xf32>
      %c0_24 = arith.constant 0 : index
      %c0_25 = arith.constant 0 : index
      %29 = vector.load %arg7[%c0_24, %c0_25] : memref<128x128xf32, #tpu.memory_space<vmem>>, vector<128x128xf32>
      %cst_26 = arith.constant dense<0.000000e+00> : vector<8x128xf32>
      %30 = tpu.matmul %28, %29, %cst_26 {dimension_numbers = #tpu.dot_dimension_numbers<[1], [0], [0], [1], [0, 0, 1, 1], [], []>} : vector<8x128xf32>, vector<128x128xf32>, vector<8x128xf32> -> vector<8x128xf32>
      %c0_27 = arith.constant 0 : index
      %c0_28 = arith.constant 0 : index
      %31 = vector.load %arg8[%c0_27, %c0_28] : memref<1x128xf32, #tpu.memory_space<vmem>>, vector<1x128xf32>
      %32 = vector.broadcast %31 : vector<1x128xf32> to vector<8x128xf32>
      %33 = arith.addf %30, %32 : vector<8x128xf32>
      %c0_29 = arith.constant 0 : index
      %c0_30 = arith.constant 0 : index
      %34 = vector.load %arg9[%c0_29, %c0_30] : memref<8x128xf32, #tpu.memory_space<vmem>>, vector<8x128xf32>
      tpu.vector_store %arg9[%c0_29, %c0_30], %33 {strides = array<i32>} : memref<8x128xf32, #tpu.memory_space<vmem>>, vector<8x128xf32>,
    } else {
    }
    return
  }
  func.func @transform_0(%arg0: i32, %arg1: i32) -> (i32, i32, i32) {
    %c0_i32 = arith.constant 0 : i32
    %c0_i32_0 = arith.constant 0 : i32
    return %arg0, %arg1, %c0_i32 : i32, i32, i32
  }
  func.func @transform_1(%arg0: i32, %arg1: i32) -> (i32, i32) {
    %c0_i32 = arith.constant 0 : i32
    %c0_i32_0 = arith.constant 0 : i32
    %c0_i32_1 = arith.constant 0 : i32
    return %c0_i32, %c0_i32_0 : i32, i32
  }
  func.func @transform_2(%arg0: i32, %arg1: i32) -> (i32, i32) {
    %c0_i32 = arith.constant 0 : i32
    %c0_i32_0 = arith.constant 0 : i32
    %c0_i32_1 = arith.constant 0 : i32
    return %c0_i32, %c0_i32_0 : i32, i32
  }
  func.func @transform_3(%arg0: i32, %arg1: i32) -> (i32, i32) {
    %c0_i32 = arith.constant 0 : i32
    %c0_i32_0 = arith.constant 0 : i32
    %c0_i32_1 = arith.constant 0 : i32
    return %c0_i32, %c0_i32_0 : i32, i32
  }
  func.func @transform_4(%arg0: i32, %arg1: i32) -> (i32, i32) {
    %c0_i32 = arith.constant 0 : i32
    %c0_i32_0 = arith.constant 0 : i32
    %c0_i32_1 = arith.constant 0 : i32
    return %c0_i32, %c0_i32_0 : i32, i32
  }
  func.func @transform_5(%arg0: i32, %arg1: i32) -> (i32, i32) {
    %c0_i32 = arith.constant 0 : i32
    %c0_i32_0 = arith.constant 0 : i32
    %c0_i32_1 = arith.constant 0 : i32
    return %c0_i32, %c0_i32_0 : i32, i32
  }
  func.func @transform_6(%arg0: i32, %arg1: i32) -> (i32, i32) {
    %c0_i32 = arith.constant 0 : i32
    %c0_i32_0 = arith.constant 0 : i32
    %c0_i32_1 = arith.constant 0 : i32
    return %c0_i32, %c0_i32_0 : i32, i32
  }
  func.func @transform_7(%arg0: i32, %arg1: i32) -> (i32, i32) {
    %c0_i32 = arith.constant 0 : i32
    %c0_i32_0 = arith.constant 0 : i32
    return %arg0, %c0_i32 : i32, i32
  }
}

</mosaic_0001>

<llo_original>
// kernel: tpu_custom_call.1
$region0: #{tpu_custom_call.1}
  #allocation0 [shape = 'u32[]', space=smem, size = 0x4, offset = 0x4, fixed_abs, tag = 'smem constant byte address 0x4 - core index']
  #allocation1 [shape = 'u32[72,128]{1,0:T(1,128)}', space=vmem, size = 0x9000, scoped, tag = 'internal scratch']
  #allocation2 [shape = 'f32[8,256]{1,0:T(8,128)}', space=vmem, size = 0x2000, scoped, tag = 'scratch operand']
  %s0 = inlined_call_operand.hbm [shape: bf16[2,8,256], index: 0, kind: input, shape index: {}]
  %s1 = inlined_call_operand.hbm [shape: f32[256,128], index: 1, kind: input, shape index: {}]
  %s2 = inlined_call_operand.vmem [shape: f32[1,128], index: 2, kind: input, shape index: {}]
  %s3 = inlined_call_operand.hbm [shape: f32[128,128], index: 3, kind: input, shape index: {}]
  %s4 = inlined_call_operand.vmem [shape: f32[1,128], index: 4, kind: input, shape index: {}]
  %s5 = inlined_call_operand.hbm [shape: f32[128,128], index: 5, kind: input, shape index: {}]
  %s6 = inlined_call_operand.vmem [shape: f32[1,128], index: 6, kind: input, shape index: {}]
  %s7 = inlined_call_operand.hbm [shape: f32[8,128], index: 7, kind: output, shape index: {}]
  %s8 = sld [smem:[#allocation0]]
  $region62: #{tpu_custom_call.1} parent=0
    _
  %s10 = ssub.s32 1, %s8
  %s11 = scalar_select 0, %s10, %s8
  $region1: #{tpu_custom_call.1} parent=0
    #allocation3 [shape = 'u8[32768]{0}', space=vmem, size = 0x8000, scoped, tag = 'input window, operand 0, single buffered']
    #allocation4 [shape = 's32[1]{0}', space=sflag, size = 0x4, scoped, tag = 'scoped memory for tpu_custom_call.1']
    #allocation5 [shape = 's32[1]{0}', space=sflag, size = 0x4, scoped, tag = 'scoped memory for tpu_custom_call.1']
    #allocation6 [shape = 'u8[131072]{0}', space=vmem, size = 0x20000, scoped, tag = 'input window, operand 1, single buffered']
    #allocation7 [shape = 's32[1]{0}', space=sflag, size = 0x4, scoped, tag = 'scoped memory for tpu_custom_call.1']
    #allocation8 [shape = 'u8[65536]{0}', space=vmem, size = 0x10000, scoped, tag = 'input window, operand 3, single buffered']
    #allocation9 [shape = 'u8[65536]{0}', space=vmem, size = 0x10000, scoped, tag = 'input window, operand 5, single buffered']
    #allocation10 [shape = 's32[1]{0}', space=sflag, size = 0x4, scoped, tag = 'scoped memory for tpu_custom_call.1']
    #allocation11 [shape = 'u8[4096]{0}', space=vmem, size = 0x1000, scoped, tag = 'output window, operand 0, single buffered']
    %12 = vsyncpa [#allocation4], 0
    %13 = vsyncpa [#allocation7], 0
    %14 = vsyncpa [#allocation10], 0
    %15 = vsyncpa [#allocation5], 0
    // Predicated region
    $region2: #{tpu_custom_call.1} parent=1 // pred_check
      _
    $region3: #{tpu_custom_call.1} parent=1 // pred_check_branch
      %17 = sbr.rel (0) target = $region5
    $region4: #{tpu_custom_call.1} parent=1 // pred_region
      %19 = vsyncadd [#allocation4], 768
      %s20 = sshll.u32 %s0, 4
      %s21 = int_to_ptr.hbm [resolvable:$true] %s20
      %s22 = sshll.u32 [#allocation3], 4
      %s23 = int_to_ptr.vmem [resolvable:$true] %s22
      %28 = dma.hbm_to_vmem [thread:$0]  %s21, 256, %s23, [#allocation4], 128, 128, 8
    $region5: #{tpu_custom_call.1} parent=1 // pred_fallthru
      _
    // Predicated region
    $region6: #{tpu_custom_call.1} parent=1 // pred_check
      _
    $region7: #{tpu_custom_call.1} parent=1 // pred_check_branch
      %30 = sbr.rel (0) target = $region9
    $region8: #{tpu_custom_call.1} parent=1 // pred_region
      %32 = vsyncadd [#allocation7], 0
      %s33 = sshll.u32 %s1, 4
      %s34 = int_to_ptr.hbm [resolvable:$true] %s33
      %s35 = sshll.u32 [#allocation6], 4
      %s36 = int_to_ptr.vmem [resolvable:$true] %s35
      %41 = dma.hbm_to_vmem [thread:$0]  %s34, 4096, %s36, [#allocation7], 128, 128, 8
    $region9: #{tpu_custom_call.1} parent=1 // pred_fallthru
      _
    // Predicated region
    $region10: #{tpu_custom_call.1} parent=1 // pred_check
      _
    $region11: #{tpu_custom_call.1} parent=1 // pred_check_branch
      %43 = sbr.rel (0) target = $region13
    $region12: #{tpu_custom_call.1} parent=1 // pred_region
      _
    $region13: #{tpu_custom_call.1} parent=1 // pred_fallthru
      _
    // Predicated region
    $region14: #{tpu_custom_call.1} parent=1 // pred_check
      _
    $region15: #{tpu_custom_call.1} parent=1 // pred_check_branch
      %45 = sbr.rel (0) target = $region17
    $region16: #{tpu_custom_call.1} parent=1 // pred_region
      %47 = vsyncadd [#allocation7], 0
      %s48 = sshll.u32 %s3, 4
      %s49 = int_to_ptr.hbm [resolvable:$true] %s48
      %s50 = sshll.u32 [#allocation8], 4
      %s51 = int_to_ptr.vmem [resolvable:$true] %s50
      %56 = dma.hbm_to_vmem [thread:$0]  %s49, 2048, %s51, [#allocation7], 128, 128, 8
    $region17: #{tpu_custom_call.1} parent=1 // pred_fallthru
      _
    // Predicated region
    $region18: #{tpu_custom_call.1} parent=1 // pred_check
      _
    $region19: #{tpu_custom_call.1} parent=1 // pred_check_branch
      %58 = sbr.rel (0) target = $region21
    $region20: #{tpu_custom_call.1} parent=1 // pred_region
      _
    $region21: #{tpu_custom_call.1} parent=1 // pred_fallthru
      _
    // Predicated region
    $region22: #{tpu_custom_call.1} parent=1 // pred_check
      _
    $region23: #{tpu_custom_call.1} parent=1 // pred_check_branch
      %60 = sbr.rel (0) target = $region25
    $region24: #{tpu_custom_call.1} parent=1 // pred_region
      %62 = vsyncadd [#allocation10], 0
      %s63 = sshll.u32 %s5, 4
      %s64 = int_to_ptr.hbm [resolvable:$true] %s63
      %s65 = sshll.u32 [#allocation9], 4
      %s66 = int_to_ptr.vmem [resolvable:$true] %s65
      %71 = dma.hbm_to_vmem [thread:$0]  %s64, 2048, %s66, [#allocation10], 128, 128, 8
    $region25: #{tpu_custom_call.1} parent=1 // pred_fallthru
      _
    // Predicated region
    $region26: #{tpu_custom_call.1} parent=1 // pred_check
      _
    $region27: #{tpu_custom_call.1} parent=1 // pred_check_branch
      %73 = sbr.rel (0) target = $region29
    $region28: #{tpu_custom_call.1} parent=1 // pred_region
      _
    $region29: #{tpu_custom_call.1} parent=1 // pred_fallthru
      _
    // Predicated region
    $region30: #{tpu_custom_call.1} parent=1 // pred_check
      _
    $region31: #{tpu_custom_call.1} parent=1 // pred_check_branch
      %75 = sbr.rel (0) target = $region33
    $region32: #{tpu_custom_call.1} parent=1 // pred_region
      %77 = dma.done [#allocation4], 1024
    $region33: #{tpu_custom_call.1} parent=1 // pred_fallthru
      _
    // Predicated region
    $region34: #{tpu_custom_call.1} parent=1 // pred_check
      _
    $region35: #{tpu_custom_call.1} parent=1 // pred_check_branch
      %79 = sbr.rel (0) target = $region37
    $region36: #{tpu_custom_call.1} parent=1 // pred_region
      %81 = dma.done [#allocation7], 4096
    $region37: #{tpu_custom_call.1} parent=1 // pred_fallthru
      _
    // Predicated region
    $region38: #{tpu_custom_call.1} parent=1 // pred_check
      _
    $region39: #{tpu_custom_call.1} parent=1 // pred_check_branch
      %83 = sbr.rel (0) target = $region41
    $region40: #{tpu_custom_call.1} parent=1 // pred_region
      %85 = dma.done [#allocation7], 2048
    $region41: #{tpu_custom_call.1} parent=1 // pred_fallthru
      _
    // Predicated region
    $region42: #{tpu_custom_call.1} parent=1 // pred_check
      _
    $region43: #{tpu_custom_call.1} parent=1 // pred_check_branch
      %87 = sbr.rel (0) target = $region45
    $region44: #{tpu_custom_call.1} parent=1 // pred_region
      %89 = dma.done [#allocation10], 2048
    $region45: #{tpu_custom_call.1} parent=1 // pred_fallthru
      _
    %p90 = scmp.eq.s32.totalorder 0, 0
    // Predicated region
    $region46: #{tpu_custom_call.1} parent=1 // pred_check
      %p91 = pneg %p90
    $region47: #{tpu_custom_call.1} parent=1 // pred_check_branch
      %93 = sbr.rel (%p91) target = $region49
    $region48: #{tpu_custom_call.1} parent=1 // pred_region
      %94 = vst [vmem:[#allocation2] sm:$0xff] 0.0
      %95 = vst [vmem:[#allocation2 + $0x8] sm:$0xff] 0.0
    $region49: #{tpu_custom_call.1} parent=1 // pred_fallthru
      _
    %v96 = vld [vmem:[#allocation2] sm:$0xff]
    %v97 = vld [vmem:[#allocation2 + $0x8] sm:$0xff]
    %v98 = vld [vmem:[#allocation3] sm:$0xff]
    %v99 = vld [vmem:[#allocation3 + $0x8] sm:$0xff]
    %v100 = vld [vmem:[#allocation3 + $0x10] sm:$0xff]
    %v101 = vld [vmem:[#allocation3 + $0x18] sm:$0xff]
    %v102 = vld [vmem:[#allocation3 + $0x20] sm:$0xff]
    %v103 = vld [vmem:[#allocation3 + $0x28] sm:$0xff]
    %v104 = vld [vmem:[#allocation3 + $0x30] sm:$0xff]
    %v105 = vld [vmem:[#allocation3 + $0x38] sm:$0xff]
    %v106 = vunpack.c.l.bf16 %v98
    %v107 = vunpack.c.h.bf16 %v98
    %v108 = vunpack.c.l.bf16 %v99
    %v109 = vunpack.c.h.bf16 %v99
    %v110 = vunpack.c.l.bf16 %v100
    %v111 = vunpack.c.h.bf16 %v100
    %v112 = vunpack.c.l.bf16 %v101
    %v113 = vunpack.c.h.bf16 %v101
    %v114 = vunpack.c.l.bf16 %v102
    %v115 = vunpack.c.h.bf16 %v102
    %v116 = vunpack.c.l.bf16 %v103
    %v117 = vunpack.c.h.bf16 %v103
    %v118 = vunpack.c.l.bf16 %v104
    %v119 = vunpack.c.h.bf16 %v104
    %v120 = vunpack.c.l.bf16 %v105
    %v121 = vunpack.c.h.bf16 %v105
    %v122 = vrot.slane %v106, 4
    %v123 = vadd.f32 %v106, %v122
    %v124 = vrot.slane %v123, 2
    %v125 = vadd.f32 %v123, %v124
    %v126 = vrot.slane %v125, 1
    %v127 = vadd.f32 %v125, %v126
    %v128 = vrot.slane %v107, 4
    %v129 = vadd.f32 %v107, %v128
    %v130 = vrot.slane %v129, 2
    %v131 = vadd.f32 %v129, %v130
    %v132 = vrot.slane %v131, 1
    %v133 = vadd.f32 %v131, %v132
    %v134 = vrot.slane %v108, 4
    %v135 = vadd.f32 %v108, %v134
    %v136 = vrot.slane %v135, 2
    %v137 = vadd.f32 %v135, %v136
    %v138 = vrot.slane %v137, 1
    %v139 = vadd.f32 %v137, %v138
    %v140 = vrot.slane %v109, 4
    %v141 = vadd.f32 %v109, %v140
    %v142 = vrot.slane %v141, 2
    %v143 = vadd.f32 %v141, %v142
    %v144 = vrot.slane %v143, 1
    %v145 = vadd.f32 %v143, %v144
    %v146 = vrot.slane %v110, 4
    %v147 = vadd.f32 %v110, %v146
    %v148 = vrot.slane %v147, 2
    %v149 = vadd.f32 %v147, %v148
    %v150 = vrot.slane %v149, 1
    %v151 = vadd.f32 %v149, %v150
    %v152 = vrot.slane %v111, 4
    %v153 = vadd.f32 %v111, %v152
    %v154 = vrot.slane %v153, 2
    %v155 = vadd.f32 %v153, %v154
    %v156 = vrot.slane %v155, 1
    %v157 = vadd.f32 %v155, %v156
    %v158 = vrot.slane %v112, 4
    %v159 = vadd.f32 %v112, %v158
    %v160 = vrot.slane %v159, 2
    %v161 = vadd.f32 %v159, %v160
    %v162 = vrot.slane %v161, 1
    %v163 = vadd.f32 %v161, %v162
    %v164 = vrot.slane %v113, 4
    %v165 = vadd.f32 %v113, %v164
    %v166 = vrot.slane %v165, 2
    %v167 = vadd.f32 %v165, %v166
    %v168 = vrot.slane %v167, 1
    %v169 = vadd.f32 %v167, %v168
    %v170 = vrot.slane %v114, 4
    %v171 = vadd.f32 %v114, %v170
    %v172 = vrot.slane %v171, 2
    %v173 = vadd.f32 %v171, %v172
    %v174 = vrot.slane %v173, 1
    %v175 = vadd.f32 %v173, %v174
    %v176 = vrot.slane %v115, 4
    %v177 = vadd.f32 %v115, %v176
    %v178 = vrot.slane %v177, 2
    %v179 = vadd.f32 %v177, %v178
    %v180 = vrot.slane %v179, 1
    %v181 = vadd.f32 %v179, %v180
    %v182 = vrot.slane %v116, 4
    %v183 = vadd.f32 %v116, %v182
    %v184 = vrot.slane %v183, 2
    %v185 = vadd.f32 %v183, %v184
    %v186 = vrot.slane %v185, 1
    %v187 = vadd.f32 %v185, %v186
    %v188 = vrot.slane %v117, 4
    %v189 = vadd.f32 %v117, %v188
    %v190 = vrot.slane %v189, 2
    %v191 = vadd.f32 %v189, %v190
    %v192 = vrot.slane %v191, 1
    %v193 = vadd.f32 %v191, %v192
    %v194 = vrot.slane %v118, 4
    %v195 = vadd.f32 %v118, %v194
    %v196 = vrot.slane %v195, 2
    %v197 = vadd.f32 %v195, %v196
    %v198 = vrot.slane %v197, 1
    %v199 = vadd.f32 %v197, %v198
    %v200 = vrot.slane %v119, 4
    %v201 = vadd.f32 %v119, %v200
    %v202 = vrot.slane %v201, 2
    %v203 = vadd.f32 %v201, %v202
    %v204 = vrot.slane %v203, 1
    %v205 = vadd.f32 %v203, %v204
    %v206 = vrot.slane %v120, 4
    %v207 = vadd.f32 %v120, %v206
    %v208 = vrot.slane %v207, 2
    %v209 = vadd.f32 %v207, %v208
    %v210 = vrot.slane %v209, 1
    %v211 = vadd.f32 %v209, %v210
    %v212 = vrot.slane %v121, 4
    %v213 = vadd.f32 %v121, %v212
    %v214 = vrot.slane %v213, 2
    %v215 = vadd.f32 %v213, %v214
    %v216 = vrot.slane %v215, 1
    %v217 = vadd.f32 %v215, %v216
    %vm234 = vcmask 1041409
    %v235 = vsel %vm234, %v139, %v127
    %vm236 = vcmask 1042434
    %v237 = vsel %vm236, %v151, %v235
    %vm238 = vcmask 1043459
    %v239 = vsel %vm238, %v163, %v237
    %vm240 = vcmask 1044484
    %v241 = vsel %vm240, %v175, %v239
    %vm242 = vcmask 1045509
    %v243 = vsel %vm242, %v187, %v241
    %vm244 = vcmask 1046534
    %v245 = vsel %vm244, %v199, %v243
    %vm246 = vcmask 1047559
    %v247 = vsel %vm246, %v211, %v245
    %v248 = vsel %vm234, %v145, %v133
    %v249 = vsel %vm236, %v157, %v248
    %v250 = vsel %vm238, %v169, %v249
    %v251 = vsel %vm240, %v181, %v250
    %v252 = vsel %vm242, %v193, %v251
    %v253 = vsel %vm244, %v205, %v252
    %v254 = vsel %vm246, %v217, %v253
    %v257 = vadd.f32 %v96, %v247
    %v258 = vadd.f32 %v97, %v254
    %259 = vst [vmem:[#allocation2] sm:$0xff] %v257
    %260 = vst [vmem:[#allocation2 + $0x8] sm:$0xff] %v258
    // Predicated region
    $region50: #{tpu_custom_call.1} parent=1 // pred_check
      %p261 = pneg %p90
    $region51: #{tpu_custom_call.1} parent=1 // pred_check_branch
      %263 = sbr.rel (%p261) target = $region53
    $region52: #{tpu_custom_call.1} parent=1 // pred_region
      %v264 = vld [vmem:[#allocation2] sm:$0xff]
      %v265 = vld [vmem:[#allocation2 + $0x8] sm:$0xff]
      %v266 = vmul.f32 %v264, 0.125
      %v267 = vmul.f32 %v265, 0.125
      %v268 = vld [vmem:[#allocation6] sm:$0xff]
      %v269 = vld [vmem:[#allocation6 + $0x8] sm:$0xff]
      %v270 = vld [vmem:[#allocation6 + $0x10] sm:$0xff]
      %v271 = vld [vmem:[#allocation6 + $0x18] sm:$0xff]
      %v272 = vld [vmem:[#allocation6 + $0x20] sm:$0xff]
      %v273 = vld [vmem:[#allocation6 + $0x28] sm:$0xff]
      %v274 = vld [vmem:[#allocation6 + $0x30] sm:$0xff]
      %v275 = vld [vmem:[#allocation6 + $0x38] sm:$0xff]
      %v276 = vld [vmem:[#allocation6 + $0x40] sm:$0xff]
      %v277 = vld [vmem:[#allocation6 + $0x48] sm:$0xff]
      %v278 = vld [vmem:[#allocation6 + $0x50] sm:$0xff]
      %v279 = vld [vmem:[#allocation6 + $0x58] sm:$0xff]
      %v280 = vld [vmem:[#allocation6 + $0x60] sm:$0xff]
      %v281 = vld [vmem:[#allocation6 + $0x68] sm:$0xff]
      %v282 = vld [vmem:[#allocation6 + $0x70] sm:$0xff]
      %v283 = vld [vmem:[#allocation6 + $0x78] sm:$0xff]
      %v284 = vld [vmem:[#allocation6 + $0x80] sm:$0xff]
      %v285 = vld [vmem:[#allocation6 + $0x88] sm:$0xff]
      %v286 = vld [vmem:[#allocation6 + $0x90] sm:$0xff]
      %v287 = vld [vmem:[#allocation6 + $0x98] sm:$0xff]
      %v288 = vld [vmem:[#allocation6 + $0xa0] sm:$0xff]
      %v289 = vld [vmem:[#allocation6 + $0xa8] sm:$0xff]
      %v290 = vld [vmem:[#allocation6 + $0xb0] sm:$0xff]
      %v291 = vld [vmem:[#allocation6 + $0xb8] sm:$0xff]
      %v292 = vld [vmem:[#allocation6 + $0xc0] sm:$0xff]
      %v293 = vld [vmem:[#allocation6 + $0xc8] sm:$0xff]
      %v294 = vld [vmem:[#allocation6 + $0xd0] sm:$0xff]
      %v295 = vld [vmem:[#allocation6 + $0xd8] sm:$0xff]
      %v296 = vld [vmem:[#allocation6 + $0xe0] sm:$0xff]
      %v297 = vld [vmem:[#allocation6 + $0xe8] sm:$0xff]
      %v298 = vld [vmem:[#allocation6 + $0xf0] sm:$0xff]
      %v299 = vld [vmem:[#allocation6 + $0xf8] sm:$0xff]
      %v300 = vld [vmem:[%s2] sm:$0x1]
      %v302 = vperm.slane %v300, 0
      %304 = vmatpush.msra.mxu0 %v283
      %305 = vmatpush.msra.mxu0 %v282
      %306 = vmatpush.msra.mxu0 %v281
      %307 = vmatpush.msra.mxu0 %v280
      %308 = vmatpush.msra.mxu0 %v279
      %309 = vmatpush.msra.mxu0 %v278
      %310 = vmatpush.msra.mxu0 %v277
      %311 = vmatpush.msra.mxu0 %v276
      %312 = vmatpush.msra.mxu0 %v275
      %313 = vmatpush.msra.mxu0 %v274
      %314 = vmatpush.msra.mxu0 %v273
      %315 = vmatpush.msra.mxu0 %v272
      %316 = vmatpush.msra.mxu0 %v271
      %317 = vmatpush.msra.mxu0 %v270
      %318 = vmatpush.msra.mxu0 %v269
      %319 = vmatpush.msra.mxu0 %v268
      %320 = vmatmul.f32.gmra.mxu0 %v266
      %v321 = vpop.f32.mrf.mxu0
      %v322 = vadd.f32 %v302, %v321
      %323 = vdwg.mxu0
      %324 = vmatpush.msra.mxu0 %v299
      %325 = vmatpush.msra.mxu0 %v298
      %326 = vmatpush.msra.mxu0 %v297
      %327 = vmatpush.msra.mxu0 %v296
      %328 = vmatpush.msra.mxu0 %v295
      %329 = vmatpush.msra.mxu0 %v294
      %330 = vmatpush.msra.mxu0 %v293
      %331 = vmatpush.msra.mxu0 %v292
      %332 = vmatpush.msra.mxu0 %v291
      %333 = vmatpush.msra.mxu0 %v290
      %334 = vmatpush.msra.mxu0 %v289
      %335 = vmatpush.msra.mxu0 %v288
      %336 = vmatpush.msra.mxu0 %v287
      %337 = vmatpush.msra.mxu0 %v286
      %338 = vmatpush.msra.mxu0 %v285
      %339 = vmatpush.msra.mxu0 %v284
      %340 = vmatmul.f32.gmra.mxu0 %v267
      %v341 = vpop.f32.mrf.mxu0
      %v342 = vadd.f32 %v322, %v341
      %343 = vdwg.mxu0
      %v344 = vmax.f32 %v342, 0.0
      %v345 = vld [vmem:[#allocation8] sm:$0xff]
      %v346 = vld [vmem:[#allocation8 + $0x8] sm:$0xff]
      %v347 = vld [vmem:[#allocation8 + $0x10] sm:$0xff]
      %v348 = vld [vmem:[#allocation8 + $0x18] sm:$0xff]
      %v349 = vld [vmem:[#allocation8 + $0x20] sm:$0xff]
      %v350 = vld [vmem:[#allocation8 + $0x28] sm:$0xff]
      %v351 = vld [vmem:[#allocation8 + $0x30] sm:$0xff]
      %v352 = vld [vmem:[#allocation8 + $0x38] sm:$0xff]
      %v353 = vld [vmem:[#allocation8 + $0x40] sm:$0xff]
      %v354 = vld [vmem:[#allocation8 + $0x48] sm:$0xff]
      %v355 = vld [vmem:[#allocation8 + $0x50] sm:$0xff]
      %v356 = vld [vmem:[#allocation8 + $0x58] sm:$0xff]
      %v357 = vld [vmem:[#allocation8 + $0x60] sm:$0xff]
      %v358 = vld [vmem:[#allocation8 + $0x68] sm:$0xff]
      %v359 = vld [vmem:[#allocation8 + $0x70] sm:$0xff]
      %v360 = vld [vmem:[#allocation8 + $0x78] sm:$0xff]
      %v361 = vld [vmem:[%s4] sm:$0x1]
      %v363 = vperm.slane %v361, 0
      %365 = vmatpush.msra.mxu0 %v360
      %366 = vmatpush.msra.mxu0 %v359
      %367 = vmatpush.msra.mxu0 %v358
      %368 = vmatpush.msra.mxu0 %v357
      %369 = vmatpush.msra.mxu0 %v356
      %370 = vmatpush.msra.mxu0 %v355
      %371 = vmatpush.msra.mxu0 %v354
      %372 = vmatpush.msra.mxu0 %v353
      %373 = vmatpush.msra.mxu0 %v352
      %374 = vmatpush.msra.mxu0 %v351
      %375 = vmatpush.msra.mxu0 %v350
      %376 = vmatpush.msra.mxu0 %v349
      %377 = vmatpush.msra.mxu0 %v348
      %378 = vmatpush.msra.mxu0 %v347
      %379 = vmatpush.msra.mxu0 %v346
      %380 = vmatpush.msra.mxu0 %v345
      %381 = vmatmul.f32.gmra.mxu0 %v344
      %v382 = vpop.f32.mrf.mxu0
      %v383 = vadd.f32 %v363, %v382
      %384 = vdwg.mxu0
      %v385 = vmax.f32 %v383, 0.0
      %v386 = vld [vmem:[#allocation9] sm:$0xff]
      %v387 = vld [vmem:[#allocation9 + $0x8] sm:$0xff]
      %v388 = vld [vmem:[#allocation9 + $0x10] sm:$0xff]
      %v389 = vld [vmem:[#allocation9 + $0x18] sm:$0xff]
      %v390 = vld [vmem:[#allocation9 + $0x20] sm:$0xff]
      %v391 = vld [vmem:[#allocation9 + $0x28] sm:$0xff]
      %v392 = vld [vmem:[#allocation9 + $0x30] sm:$0xff]
      %v393 = vld [vmem:[#allocation9 + $0x38] sm:$0xff]
      %v394 = vld [vmem:[#allocation9 + $0x40] sm:$0xff]
      %v395 = vld [vmem:[#allocation9 + $0x48] sm:$0xff]
      %v396 = vld [vmem:[#allocation9 + $0x50] sm:$0xff]
      %v397 = vld [vmem:[#allocation9 + $0x58] sm:$0xff]
      %v398 = vld [vmem:[#allocation9 + $0x60] sm:$0xff]
      %v399 = vld [vmem:[#allocation9 + $0x68] sm:$0xff]
      %v400 = vld [vmem:[#allocation9 + $0x70] sm:$0xff]
      %v401 = vld [vmem:[#allocation9 + $0x78] sm:$0xff]
      %v402 = vld [vmem:[%s6] sm:$0x1]
      %v404 = vperm.slane %v402, 0
      %406 = vmatpush.msra.mxu0 %v401
      %407 = vmatpush.msra.mxu0 %v400
      %408 = vmatpush.msra.mxu0 %v399
      %409 = vmatpush.msra.mxu0 %v398
      %410 = vmatpush.msra.mxu0 %v397
      %411 = vmatpush.msra.mxu0 %v396
      %412 = vmatpush.msra.mxu0 %v395
      %413 = vmatpush.msra.mxu0 %v394
      %414 = vmatpush.msra.mxu0 %v393
      %415 = vmatpush.msra.mxu0 %v392
      %416 = vmatpush.msra.mxu0 %v391
      %417 = vmatpush.msra.mxu0 %v390
      %418 = vmatpush.msra.mxu0 %v389
      %419 = vmatpush.msra.mxu0 %v388
      %420 = vmatpush.msra.mxu0 %v387
      %421 = vmatpush.msra.mxu0 %v386
      %422 = vmatmul.f32.gmra.mxu0 %v385
      %v423 = vpop.f32.mrf.mxu0
      %v424 = vadd.f32 %v404, %v423
      %425 = vdwg.mxu0
      %426 = vst [vmem:[#allocation11] sm:$0xff] %v424
    $region53: #{tpu_custom_call.1} parent=1 // pred_fallthru
      _
    // Predicated region
    $region54: #{tpu_custom_call.1} parent=1 // pred_check
      _
    $region55: #{tpu_custom_call.1} parent=1 // pred_check_branch
      %428 = sbr.rel (0) target = $region57
    $region56: #{tpu_custom_call.1} parent=1 // pred_region
      %430 = vsyncadd [#allocation5], 0
      %s432 = sshll.u32 [#allocation11], 4
      %s433 = int_to_ptr.vmem [resolvable:$true] %s432
      %s434 = sshll.u32 %s7, 4
      %s435 = int_to_ptr.hbm [resolvable:$true] %s434
      %437 = dma.vmem_to_hbm [thread:$0]  %s433, 128, %s435, [#allocation5]
    $region57: #{tpu_custom_call.1} parent=1 // pred_fallthru
      _
    // Predicated region
    $region58: #{tpu_custom_call.1} parent=1 // pred_check
      _
    $region59: #{tpu_custom_call.1} parent=1 // pred_check_branch
      %439 = sbr.rel (0) target = $region61
    $region60: #{tpu_custom_call.1} parent=1 // pred_region
      %441 = dma.done [#allocation5], 128
    $region61: #{tpu_custom_call.1} parent=1 // pred_fallthru
      _
    %442 = vsyncpa [#allocation4], 1
    %443 = vsyncpa [#allocation7], 1
    %444 = vsyncpa [#allocation10], 1
    %445 = vsyncpa [#allocation5], 1

</llo_original>
